<compile_context>
chip_gen: v7x
topology: tpu7x:2x2x1
jax: 0.10.0
libtpu: 0.0.40
codegen_flags: <defaults>
</compile_context>

<pallas_src>
import jax
import jax.numpy as jnp
from jax import lax
from jax.experimental import pallas as pl
from jax.experimental.pallas import tpu as pltpu

_H1 = 256       # hidden 1
_H2 = 512       # hidden 2
_OUT = 181      # true output width
_OUT_PAD = 256  # lane-dense (multiple of 128) padded output width
_IN = 5         # input features


def _round_up(n, m):
    return ((n + m - 1) // m) * m


def _gelu_exact(x):
    # PyTorch nn.GELU() default (approximate='none'): 0.5*x*(1 + erf(x/sqrt(2)))
    return 0.5 * x * (1.0 + lax.erf(x * (1.0 / jnp.sqrt(2.0).astype(x.dtype))))


def mlp_kernel(x_ref, w1_ref, b1_ref, w2_ref, b2_ref, w3_ref, b3_ref, o_ref):
    x = x_ref[...]

    # Layer 1: (TB, 5) @ (5, 256) + b1  -> GELU
    h1 = jnp.dot(x, w1_ref[...], preferred_element_type=jnp.float32) + b1_ref[...]
    h1 = _gelu_exact(h1)

    # Layers 2+3, split along the 512-wide hidden dim into two 256-wide halves.
    # Each half: matmul -> bias -> GELU -> partial contribution to the output,
    # which keeps only one (TB, 256) activation slab live at a time.
    h2a = jnp.dot(h1, w2_ref[:, 0:256], preferred_element_type=jnp.float32) + b2_ref[:, 0:256]
    h2a = _gelu_exact(h2a)
    out = jnp.dot(h2a, w3_ref[0:256, :], preferred_element_type=jnp.float32)

    h2b = jnp.dot(h1, w2_ref[:, 256:512], preferred_element_type=jnp.float32) + b2_ref[:, 256:512]
    h2b = _gelu_exact(h2b)
    out = out + jnp.dot(h2b, w3_ref[256:512, :], preferred_element_type=jnp.float32)

    out = out + b3_ref[...]
    o_ref[...] = out.astype(o_ref.dtype)


def mlp_forward(x, params, *, tb=256):
    """x: (B, 5) float32. params: dict of w1,b1,w2,b2,w3,b3. Returns (B, 181)."""
    B = x.shape[0]

    w1, b1 = params["w1"], params["b1"].reshape(1, -1)
    w2, b2 = params["w2"], params["b2"].reshape(1, -1)
    w3, b3 = params["w3"], params["b3"].reshape(1, -1)

    # Lane-dense output: zero-pad w3/b3 from 181 -> 256 output lanes.
    w3p = jnp.pad(w3, ((0, 0), (0, _OUT_PAD - _OUT)))
    b3p = jnp.pad(b3, ((0, 0), (0, _OUT_PAD - _OUT)))

    # Batch tile: multiple of 8 sublanes, no bigger than the (rounded-up) batch.
    tb = max(8, min(tb, _round_up(B, 8)))
    tb = _round_up(tb, 8)
    B_pad = _round_up(B, tb)
    if B_pad != B:
        x = jnp.pad(x, ((0, B_pad - B), (0, 0)))

    grid = (B_pad // tb,)

    resident = lambda shape: pl.BlockSpec(shape, lambda i: (0, 0))  # weights stay in VMEM

    out = pl.pallas_call(
        mlp_kernel,
        out_shape=jax.ShapeDtypeStruct((B_pad, _OUT_PAD), jnp.float32),
        grid_spec=pltpu.PrefetchScalarGridSpec(
            num_scalar_prefetch=0,
            grid=grid,
            in_specs=[
                pl.BlockSpec((tb, _IN), lambda i: (i, 0)),     # x tile
                resident((_IN, _H1)), resident((1, _H1)),      # w1, b1
                resident((_H1, _H2)), resident((1, _H2)),      # w2, b2
                resident((_H2, _OUT_PAD)), resident((1, _OUT_PAD)),  # w3, b3 (padded)
            ],
            out_specs=pl.BlockSpec((tb, _OUT_PAD), lambda i: (i, 0)),
        ),
        compiler_params=pltpu.CompilerParams(
            dimension_semantics=("parallel",),   # megacore sharding on v7x
            vmem_limit_bytes=32 * 1024 * 1024,
        ),
    )(x, w1, b1, w2, b2, w3p, b3p)

    return out[:B, :_OUT]


def init_params(key):
    """Deterministic init mimicking PyTorch Linear default: U(-1/sqrt(fan_in), +1/sqrt(fan_in))."""
    dims = [(_IN, _H1), (_H1, _H2), (_H2, _OUT)]
    params = {}
    keys = jax.random.split(key, 2 * len(dims))
    for i, (fan_in, fan_out) in enumerate(dims):
        bound = 1.0 / jnp.sqrt(float(fan_in))
        w = jax.random.uniform(keys[2 * i], (fan_in, fan_out), jnp.float32,
                               minval=-bound, maxval=bound)
        b = jax.random.uniform(keys[2 * i + 1], (fan_out,), jnp.float32,
                               minval=-bound, maxval=bound)
        params[f"w{i+1}"] = w
        params[f"b{i+1}"] = b
    return params


def mlp_reference(x, params):
    h = x @ params["w1"] + params["b1"]
    h = 0.5 * h * (1.0 + lax.erf(h / jnp.sqrt(2.0)))
    h = h @ params["w2"] + params["b2"]
    h = 0.5 * h * (1.0 + lax.erf(h / jnp.sqrt(2.0)))
    return h @ params["w3"] + params["b3"]


if __name__ == "__main__":
    key = jax.random.PRNGKey(0)
    k_param, k_x, k_x2 = jax.random.split(key, 3)

    params = init_params(k_param)

    # Small batch consistent with the module: (B, 5) features
    # (L, mu, t, delta, disorder_strength).
    B = 8
    x = jax.random.normal(k_x, (B, _IN), dtype=jnp.float32)

    out = mlp_forward(x, params)
    out = jax.block_until_ready(out)
    ref = mlp_reference(x, params)
    assert out.shape == (B, _OUT), out.shape
    assert jnp.allclose(out, ref, atol=1e-4, rtol=1e-4), float(jnp.max(jnp.abs(out - ref)))

    # Exercise the batch-grid / padding path (multiple grid steps, ragged batch).
    B2 = 130
    x2 = jax.random.normal(k_x2, (B2, _IN), dtype=jnp.float32)
    out2 = jax.block_until_ready(mlp_forward(x2, params, tb=64))
    ref2 = mlp_reference(x2, params)
    assert out2.shape == (B2, _OUT), out2.shape
    assert jnp.allclose(out2, ref2, atol=1e-4, rtol=1e-4), float(jnp.max(jnp.abs(out2 - ref2)))

    print("KERNEL_OK")
</pallas_src>

<mosaic_0001>
module attributes {stable_mosaic.version = 11 : i64} {
  func.func @mlp_kernel(%arg0: i32, %arg1: memref<8x5xf32, #tpu.memory_space<vmem>>, %arg2: memref<5x256xf32, #tpu.memory_space<vmem>>, %arg3: memref<1x256xf32, #tpu.memory_space<vmem>>, %arg4: memref<256x512xf32, #tpu.memory_space<vmem>>, %arg5: memref<1x512xf32, #tpu.memory_space<vmem>>, %arg6: memref<512x256xf32, #tpu.memory_space<vmem>>, %arg7: memref<1x256xf32, #tpu.memory_space<vmem>>, %arg8: memref<8x256xf32, #tpu.memory_space<vmem>>) attributes {dimension_semantics = [#tpu.dimension_semantics<parallel>], iteration_bounds = array<i64: 1>, scalar_prefetch = 0 : i64, scratch_operands = 0 : i64, tpu.core_type = #tpu.core_type<tc>, window_params = [{transform_indices = @transform_0, window_bounds = array<i64: 8, 5>}, {pipeline_mode = #tpu.pipeline_mode<synchronous>, transform_indices = @transform_1, window_bounds = array<i64: 5, 256>}, {pipeline_mode = #tpu.pipeline_mode<synchronous>, transform_indices = @transform_2, window_bounds = array<i64: 1, 256>}, {pipeline_mode = #tpu.pipeline_mode<synchronous>, transform_indices = @transform_3, window_bounds = array<i64: 256, 512>}, {pipeline_mode = #tpu.pipeline_mode<synchronous>, transform_indices = @transform_4, window_bounds = array<i64: 1, 512>}, {pipeline_mode = #tpu.pipeline_mode<synchronous>, transform_indices = @transform_5, window_bounds = array<i64: 512, 256>}, {pipeline_mode = #tpu.pipeline_mode<synchronous>, transform_indices = @transform_6, window_bounds = array<i64: 1, 256>}, {transform_indices = @transform_7, window_bounds = array<i64: 8, 256>}]} {
    %c0 = arith.constant 0 : index
    %c0_0 = arith.constant 0 : index
    %0 = vector.load %arg1[%c0, %c0_0] : memref<8x5xf32, #tpu.memory_space<vmem>>, vector<8x5xf32>
    %c0_1 = arith.constant 0 : index
    %c0_2 = arith.constant 0 : index
    %1 = vector.load %arg2[%c0_1, %c0_2] : memref<5x256xf32, #tpu.memory_space<vmem>>, vector<5x256xf32>
    %cst = arith.constant dense<0.000000e+00> : vector<8x256xf32>
    %2 = tpu.matmul %0, %1, %cst {dimension_numbers = #tpu.dot_dimension_numbers<[1], [0], [0], [1], [0, 0, 1, 1], [], []>} : vector<8x5xf32>, vector<5x256xf32>, vector<8x256xf32> -> vector<8x256xf32>
    %c0_3 = arith.constant 0 : index
    %c0_4 = arith.constant 0 : index
    %3 = vector.load %arg3[%c0_3, %c0_4] : memref<1x256xf32, #tpu.memory_space<vmem>>, vector<1x256xf32>
    %4 = vector.broadcast %3 : vector<1x256xf32> to vector<8x256xf32>
    %5 = arith.addf %2, %4 : vector<8x256xf32>
    %cst_5 = arith.constant 5.000000e-01 : f32
    %6 = vector.broadcast %cst_5 : f32 to vector<8x256xf32>
    %7 = arith.mulf %6, %5 : vector<8x256xf32>
    %cst_6 = arith.constant 2.000000e+00 : f32
    %8 = math.sqrt %cst_6 : f32
    %cst_7 = arith.constant 1.000000e+00 : f32
    %9 = arith.divf %cst_7, %8 : f32
    %10 = vector.broadcast %9 : f32 to vector<8x256xf32>
    %11 = arith.mulf %5, %10 : vector<8x256xf32>
    %12 = math.erf %11 : vector<8x256xf32>
    %cst_8 = arith.constant 1.000000e+00 : f32
    %13 = vector.broadcast %cst_8 : f32 to vector<8x256xf32>
    %14 = arith.addf %13, %12 : vector<8x256xf32>
    %15 = arith.mulf %7, %14 : vector<8x256xf32>
    %c0_9 = arith.constant 0 : index
    %c0_10 = arith.constant 0 : index
    %16 = vector.load %arg4[%c0_9, %c0_10] : memref<256x512xf32, #tpu.memory_space<vmem>>, vector<256x256xf32>
    %cst_11 = arith.constant dense<0.000000e+00> : vector<8x256xf32>
    %17 = tpu.matmul %15, %16, %cst_11 {dimension_numbers = #tpu.dot_dimension_numbers<[1], [0], [0], [1], [0, 0, 1, 1], [], []>} : vector<8x256xf32>, vector<256x256xf32>, vector<8x256xf32> -> vector<8x256xf32>
    %c0_12 = arith.constant 0 : index
    %c0_13 = arith.constant 0 : index
    %18 = vector.load %arg5[%c0_12, %c0_13] : memref<1x512xf32, #tpu.memory_space<vmem>>, vector<1x256xf32>
    %19 = vector.broadcast %18 : vector<1x256xf32> to vector<8x256xf32>
    %20 = arith.addf %17, %19 : vector<8x256xf32>
    %cst_14 = arith.constant 5.000000e-01 : f32
    %21 = vector.broadcast %cst_14 : f32 to vector<8x256xf32>
    %22 = arith.mulf %21, %20 : vector<8x256xf32>
    %cst_15 = arith.constant 2.000000e+00 : f32
    %23 = math.sqrt %cst_15 : f32
    %cst_16 = arith.constant 1.000000e+00 : f32
    %24 = arith.divf %cst_16, %23 : f32
    %25 = vector.broadcast %24 : f32 to vector<8x256xf32>
    %26 = arith.mulf %20, %25 : vector<8x256xf32>
    %27 = math.erf %26 : vector<8x256xf32>
    %cst_17 = arith.constant 1.000000e+00 : f32
    %28 = vector.broadcast %cst_17 : f32 to vector<8x256xf32>
    %29 = arith.addf %28, %27 : vector<8x256xf32>
    %30 = arith.mulf %22, %29 : vector<8x256xf32>
    %c0_18 = arith.constant 0 : index
    %c0_19 = arith.constant 0 : index
    %31 = vector.load %arg6[%c0_18, %c0_19] : memref<512x256xf32, #tpu.memory_space<vmem>>, vector<256x256xf32>
    %cst_20 = arith.constant dense<0.000000e+00> : vector<8x256xf32>
    %32 = tpu.matmul %30, %31, %cst_20 {dimension_numbers = #tpu.dot_dimension_numbers<[1], [0], [0], [1], [0, 0, 1, 1], [], []>} : vector<8x256xf32>, vector<256x256xf32>, vector<8x256xf32> -> vector<8x256xf32>
    %c0_21 = arith.constant 0 : index
    %c256 = arith.constant 256 : index
    %33 = vector.load %arg4[%c0_21, %c256] : memref<256x512xf32, #tpu.memory_space<vmem>>, vector<256x256xf32>
    %cst_22 = arith.constant dense<0.000000e+00> : vector<8x256xf32>
    %34 = tpu.matmul %15, %33, %cst_22 {dimension_numbers = #tpu.dot_dimension_numbers<[1], [0], [0], [1], [0, 0, 1, 1], [], []>} : vector<8x256xf32>, vector<256x256xf32>, vector<8x256xf32> -> vector<8x256xf32>
    %c0_23 = arith.constant 0 : index
    %c256_24 = arith.constant 256 : index
    %35 = vector.load %arg5[%c0_23, %c256_24] : memref<1x512xf32, #tpu.memory_space<vmem>>, vector<1x256xf32>
    %36 = vector.broadcast %35 : vector<1x256xf32> to vector<8x256xf32>
    %37 = arith.addf %34, %36 : vector<8x256xf32>
    %cst_25 = arith.constant 5.000000e-01 : f32
    %38 = vector.broadcast %cst_25 : f32 to vector<8x256xf32>
    %39 = arith.mulf %38, %37 : vector<8x256xf32>
    %cst_26 = arith.constant 2.000000e+00 : f32
    %40 = math.sqrt %cst_26 : f32
    %cst_27 = arith.constant 1.000000e+00 : f32
    %41 = arith.divf %cst_27, %40 : f32
    %42 = vector.broadcast %41 : f32 to vector<8x256xf32>
    %43 = arith.mulf %37, %42 : vector<8x256xf32>
    %44 = math.erf %43 : vector<8x256xf32>
    %cst_28 = arith.constant 1.000000e+00 : f32
    %45 = vector.broadcast %cst_28 : f32 to vector<8x256xf32>
    %46 = arith.addf %45, %44 : vector<8x256xf32>
    %47 = arith.mulf %39, %46 : vector<8x256xf32>
    %c256_29 = arith.constant 256 : index
    %c0_30 = arith.constant 0 : index
    %48 = vector.load %arg6[%c256_29, %c0_30] : memref<512x256xf32, #tpu.memory_space<vmem>>, vector<256x256xf32>
    %cst_31 = arith.constant dense<0.000000e+00> : vector<8x256xf32>
    %49 = tpu.matmul %47, %48, %cst_31 {dimension_numbers = #tpu.dot_dimension_numbers<[1], [0], [0], [1], [0, 0, 1, 1], [], []>} : vector<8x256xf32>, vector<256x256xf32>, vector<8x256xf32> -> vector<8x256xf32>
    %50 = arith.addf %32, %49 : vector<8x256xf32>
    %c0_32 = arith.constant 0 : index
    %c0_33 = arith.constant 0 : index
    %51 = vector.load %arg7[%c0_32, %c0_33] : memref<1x256xf32, #tpu.memory_space<vmem>>, vector<1x256xf32>
    %52 = vector.broadcast %51 : vector<1x256xf32> to vector<8x256xf32>
    %53 = arith.addf %50, %52 : vector<8x256xf32>
    %c0_34 = arith.constant 0 : index
    %c0_35 = arith.constant 0 : index
    %54 = vector.load %arg8[%c0_34, %c0_35] : memref<8x256xf32, #tpu.memory_space<vmem>>, vector<8x256xf32>
    tpu.vector_store %arg8[%c0_34, %c0_35], %53 {strides = array<i32>} : memref<8x256xf32, #tpu.memory_space<vmem>>, vector<8x256xf32>,
    return
  }
  func.func @transform_0(%arg0: i32) -> (i32, i32) {
    %c0_i32 = arith.constant 0 : i32
    %c0_i32_0 = arith.constant 0 : i32
    return %arg0, %c0_i32 : i32, i32
  }
  func.func @transform_1(%arg0: i32) -> (i32, i32) {
    %c0_i32 = arith.constant 0 : i32
    %c0_i32_0 = arith.constant 0 : i32
    %c0_i32_1 = arith.constant 0 : i32
    return %c0_i32, %c0_i32_0 : i32, i32
  }
  func.func @transform_2(%arg0: i32) -> (i32, i32) {
    %c0_i32 = arith.constant 0 : i32
    %c0_i32_0 = arith.constant 0 : i32
    %c0_i32_1 = arith.constant 0 : i32
    return %c0_i32, %c0_i32_0 : i32, i32
  }
  func.func @transform_3(%arg0: i32) -> (i32, i32) {
    %c0_i32 = arith.constant 0 : i32
    %c0_i32_0 = arith.constant 0 : i32
    %c0_i32_1 = arith.constant 0 : i32
    return %c0_i32, %c0_i32_0 : i32, i32
  }
  func.func @transform_4(%arg0: i32) -> (i32, i32) {
    %c0_i32 = arith.constant 0 : i32
    %c0_i32_0 = arith.constant 0 : i32
    %c0_i32_1 = arith.constant 0 : i32
    return %c0_i32, %c0_i32_0 : i32, i32
  }
  func.func @transform_5(%arg0: i32) -> (i32, i32) {
    %c0_i32 = arith.constant 0 : i32
    %c0_i32_0 = arith.constant 0 : i32
    %c0_i32_1 = arith.constant 0 : i32
    return %c0_i32, %c0_i32_0 : i32, i32
  }
  func.func @transform_6(%arg0: i32) -> (i32, i32) {
    %c0_i32 = arith.constant 0 : i32
    %c0_i32_0 = arith.constant 0 : i32
    %c0_i32_1 = arith.constant 0 : i32
    return %c0_i32, %c0_i32_0 : i32, i32
  }
  func.func @transform_7(%arg0: i32) -> (i32, i32) {
    %c0_i32 = arith.constant 0 : i32
    %c0_i32_0 = arith.constant 0 : i32
    return %arg0, %c0_i32 : i32, i32
  }
}

</mosaic_0001>

<llo_original>
// kernel: tpu_custom_call.1
$region0: #{tpu_custom_call.1}
  #allocation0 [shape = 'u32[]', space=smem, size = 0x4, offset = 0x4, fixed_abs, tag = 'smem constant byte address 0x4 - core index']
  #allocation1 [shape = 'u32[144,128]{1,0:T(1,128)}', space=vmem, size = 0x12000, scoped, tag = 'internal scratch']
  %s0 = inlined_call_operand.hbm [shape: f32[8,5], index: 0, kind: input, shape index: {}]
  %s1 = inlined_call_operand.hbm [shape: f32[5,256], index: 1, kind: input, shape index: {}]
  %s2 = inlined_call_operand.vmem [shape: f32[1,256], index: 2, kind: input, shape index: {}]
  %s3 = inlined_call_operand.hbm [shape: f32[256,512], index: 3, kind: input, shape index: {}]
  %s4 = inlined_call_operand.vmem [shape: f32[1,512], index: 4, kind: input, shape index: {}]
  %s5 = inlined_call_operand.hbm [shape: f32[512,256], index: 5, kind: input, shape index: {}]
  %s6 = inlined_call_operand.vmem [shape: f32[1,256], index: 6, kind: input, shape index: {}]
  %s7 = inlined_call_operand.hbm [shape: f32[8,256], index: 7, kind: output, shape index: {}]
  %s8 = sld [smem:[#allocation0]]
  $region54: #{tpu_custom_call.1} parent=0
    _
  %s10 = ssub.s32 1, %s8
  %s11 = scalar_select 0, %s10, %s8
  $region1: #{tpu_custom_call.1} parent=0
    #allocation2 [shape = 'u8[4096]{0}', space=vmem, size = 0x1000, scoped, tag = 'input window, operand 0, single buffered']
    #allocation3 [shape = 's32[1]{0}', space=sflag, size = 0x4, scoped, tag = 'scoped memory for tpu_custom_call.1']
    #allocation4 [shape = 's32[1]{0}', space=sflag, size = 0x4, scoped, tag = 'scoped memory for tpu_custom_call.1']
    #allocation5 [shape = 'u8[8192]{0}', space=vmem, size = 0x2000, scoped, tag = 'input window, operand 1, single buffered']
    #allocation6 [shape = 's32[1]{0}', space=sflag, size = 0x4, scoped, tag = 'scoped memory for tpu_custom_call.1']
    #allocation7 [shape = 'u8[524288]{0}', space=vmem, size = 0x80000, scoped, tag = 'input window, operand 3, single buffered']
    #allocation8 [shape = 'u8[524288]{0}', space=vmem, size = 0x80000, scoped, tag = 'input window, operand 5, single buffered']
    #allocation9 [shape = 's32[1]{0}', space=sflag, size = 0x4, scoped, tag = 'scoped memory for tpu_custom_call.1']
    #allocation10 [shape = 'u8[8192]{0}', space=vmem, size = 0x2000, scoped, tag = 'output window, operand 0, single buffered']
    %12 = vsyncpa [#allocation3], 0
    %13 = vsyncpa [#allocation6], 0
    %14 = vsyncpa [#allocation9], 0
    %15 = vsyncpa [#allocation4], 0
    // Predicated region
    $region2: #{tpu_custom_call.1} parent=1 // pred_check
      _
    $region3: #{tpu_custom_call.1} parent=1 // pred_check_branch
      %17 = sbr.rel (0) target = $region5
    $region4: #{tpu_custom_call.1} parent=1 // pred_region
      %s19 = ssub.s32 128, 128
      %20 = vsyncadd [#allocation3], %s19
      %s22 = sshll.u32 [#allocation2], 4
      %s23 = int_to_ptr.vmem [resolvable:$true] %s22
      %25 = dma.hbm_to_vmem [thread:$0]  %s0, 128, %s23, [#allocation3]
    $region5: #{tpu_custom_call.1} parent=1 // pred_fallthru
      _
    // Predicated region
    $region6: #{tpu_custom_call.1} parent=1 // pred_check
      _
    $region7: #{tpu_custom_call.1} parent=1 // pred_check_branch
      %27 = sbr.rel (0) target = $region9
    $region8: #{tpu_custom_call.1} parent=1 // pred_region
      %s29 = ssub.s32 256, 256
      %30 = vsyncadd [#allocation6], %s29
      %s32 = sshll.u32 [#allocation5], 4
      %s33 = int_to_ptr.vmem [resolvable:$true] %s32
      %35 = dma.hbm_to_vmem [thread:$0]  %s1, 256, %s33, [#allocation6]
    $region9: #{tpu_custom_call.1} parent=1 // pred_fallthru
      _
    // Predicated region
    $region10: #{tpu_custom_call.1} parent=1 // pred_check
      _
    $region11: #{tpu_custom_call.1} parent=1 // pred_check_branch
      %37 = sbr.rel (0) target = $region13
    $region12: #{tpu_custom_call.1} parent=1 // pred_region
      _
    $region13: #{tpu_custom_call.1} parent=1 // pred_fallthru
      _
    // Predicated region
    $region14: #{tpu_custom_call.1} parent=1 // pred_check
      _
    $region15: #{tpu_custom_call.1} parent=1 // pred_check_branch
      %39 = sbr.rel (0) target = $region17
    $region16: #{tpu_custom_call.1} parent=1 // pred_region
      %s41 = ssub.s32 16384, 16384
      %42 = vsyncadd [#allocation6], %s41
      %s43 = sshll.u32 [#allocation7], 4
      %s44 = int_to_ptr.vmem [resolvable:$true] %s43
      %49 = dma.hbm_to_vmem [thread:$0]  %s3, 16384, %s44, [#allocation6], 512, 512, 32
    $region17: #{tpu_custom_call.1} parent=1 // pred_fallthru
      _
    // Predicated region
    $region18: #{tpu_custom_call.1} parent=1 // pred_check
      _
    $region19: #{tpu_custom_call.1} parent=1 // pred_check_branch
      %51 = sbr.rel (0) target = $region21
    $region20: #{tpu_custom_call.1} parent=1 // pred_region
      _
    $region21: #{tpu_custom_call.1} parent=1 // pred_fallthru
      _
    // Predicated region
    $region22: #{tpu_custom_call.1} parent=1 // pred_check
      _
    $region23: #{tpu_custom_call.1} parent=1 // pred_check_branch
      %53 = sbr.rel (0) target = $region25
    $region24: #{tpu_custom_call.1} parent=1 // pred_region
      %s55 = ssub.s32 16384, 16384
      %56 = vsyncadd [#allocation9], %s55
      %s57 = sshll.u32 [#allocation8], 4
      %s58 = int_to_ptr.vmem [resolvable:$true] %s57
      %63 = dma.hbm_to_vmem [thread:$0]  %s5, 16384, %s58, [#allocation9], 256, 256, 16
    $region25: #{tpu_custom_call.1} parent=1 // pred_fallthru
      _
    // Predicated region
    $region26: #{tpu_custom_call.1} parent=1 // pred_check
      _
    $region27: #{tpu_custom_call.1} parent=1 // pred_check_branch
      %65 = sbr.rel (0) target = $region29
    $region28: #{tpu_custom_call.1} parent=1 // pred_region
      _
    $region29: #{tpu_custom_call.1} parent=1 // pred_fallthru
      _
    // Predicated region
    $region30: #{tpu_custom_call.1} parent=1 // pred_check
      _
    $region31: #{tpu_custom_call.1} parent=1 // pred_check_branch
      %67 = sbr.rel (0) target = $region33
    $region32: #{tpu_custom_call.1} parent=1 // pred_region
      %68 = dma.done [#allocation3], 128
    $region33: #{tpu_custom_call.1} parent=1 // pred_fallthru
      _
    // Predicated region
    $region34: #{tpu_custom_call.1} parent=1 // pred_check
      _
    $region35: #{tpu_custom_call.1} parent=1 // pred_check_branch
      %70 = sbr.rel (0) target = $region37
    $region36: #{tpu_custom_call.1} parent=1 // pred_region
      %71 = dma.done [#allocation6], 256
    $region37: #{tpu_custom_call.1} parent=1 // pred_fallthru
      _
    // Predicated region
    $region38: #{tpu_custom_call.1} parent=1 // pred_check
      _
    $region39: #{tpu_custom_call.1} parent=1 // pred_check_branch
      %73 = sbr.rel (0) target = $region41
    $region40: #{tpu_custom_call.1} parent=1 // pred_region
      %74 = dma.done [#allocation6], 16384
    $region41: #{tpu_custom_call.1} parent=1 // pred_fallthru
      _
    // Predicated region
    $region42: #{tpu_custom_call.1} parent=1 // pred_check
      _
    $region43: #{tpu_custom_call.1} parent=1 // pred_check_branch
      %76 = sbr.rel (0) target = $region45
    $region44: #{tpu_custom_call.1} parent=1 // pred_region
      %77 = dma.done [#allocation9], 16384
    $region45: #{tpu_custom_call.1} parent=1 // pred_fallthru
      _
    %v78 = vld [vmem:[#allocation2] sm:$0xff]
    %v79 = vld [vmem:[#allocation5] sm:$0x1f]
    %v80 = vld [vmem:[#allocation5 + $0x8] sm:$0x1f]
    %v81 = vld [vmem:[%s2] sm:$0x3]
    %v83 = vlaneseq
    %v84 = vshrl.u32 %v83, 7
    %v85 = vsub.s32 0, %v84
    %v86 = vrot.slane %v81, %v85
    %v87 = vlaneseq
    %v88 = vshrl.u32 %v87, 7
    %v89 = vsub.s32 1, %v88
    %v90 = vrot.slane %v81, %v89
    %vm93 = vcmask 39936
    %v95 = vsel %vm93, %v78, 0
    %vm97 = vcmask 1044480
    %v99 = vsel %vm97, %v79, 0
    %v102 = vsel %vm97, %v80, 0
    %104 = vmatprep.subr.mxu0 %v102
    %105 = vmatpush1.msra.mxu0 %v99
    %106 = vmatprep.subr.mxu0 0.0
    %107 = vmatpush1.msra.mxu0 0.0
    %108 = vmatprep.subr.mxu0 0.0
    %109 = vmatpush1.msra.mxu0 0.0
    %110 = vmatprep.subr.mxu0 0.0
    %111 = vmatpush1.msra.mxu0 0.0
    %112 = vmatprep.subr.mxu0 0.0
    %113 = vmatpush1.msra.mxu0 0.0
    %114 = vmatprep.subr.mxu0 0.0
    %115 = vmatpush1.msra.mxu0 0.0
    %116 = vmatprep.subr.mxu0 0.0
    %117 = vmatpush1.msra.mxu0 0.0
    %118 = vmatprep.subr.mxu0 0.0
    %119 = vmatpush1.msra.mxu0 0.0
    %120 = vmatprep.subr.mxu0 0.0
    %121 = vmatpush1.msra.mxu0 0.0
    %122 = vmatprep.subr.mxu0 0.0
    %123 = vmatpush1.msra.mxu0 0.0
    %124 = vmatprep.subr.mxu0 0.0
    %125 = vmatpush1.msra.mxu0 0.0
    %126 = vmatprep.subr.mxu0 0.0
    %127 = vmatpush1.msra.mxu0 0.0
    %128 = vmatprep.subr.mxu0 0.0
    %129 = vmatpush1.msra.mxu0 0.0
    %130 = vmatprep.subr.mxu0 0.0
    %131 = vmatpush1.msra.mxu0 0.0
    %132 = vmatprep.subr.mxu0 0.0
    %133 = vmatpush1.msra.mxu0 0.0
    %134 = vmatprep.subr.mxu0 0.0
    %135 = vmatpush1.msra.mxu0 0.0
    %136 = vmatprep.subr.mxu0 0.0
    %137 = vmatpush1.msra.mxu0 0.0
    %138 = vmatprep.subr.mxu0 0.0
    %139 = vmatpush1.msra.mxu0 0.0
    %140 = vmatprep.subr.mxu0 0.0
    %141 = vmatpush1.msra.mxu0 0.0
    %142 = vmatprep.subr.mxu0 0.0
    %143 = vmatpush1.msra.mxu0 0.0
    %144 = vmatprep.subr.mxu0 0.0
    %145 = vmatpush1.msra.mxu0 0.0
    %146 = vmatprep.subr.mxu0 0.0
    %147 = vmatpush1.msra.mxu0 0.0
    %148 = vmatprep.subr.mxu0 0.0
    %149 = vmatpush1.msra.mxu0 0.0
    %150 = vmatprep.subr.mxu0 0.0
    %151 = vmatpush1.msra.mxu0 0.0
    %152 = vmatprep.subr.mxu0 0.0
    %153 = vmatpush1.msra.mxu0 0.0
    %154 = vmatprep.subr.mxu0 0.0
    %155 = vmatpush1.msra.mxu0 0.0
    %156 = vmatprep.subr.mxu0 0.0
    %157 = vmatpush1.msra.mxu0 0.0
    %158 = vmatprep.subr.mxu0 0.0
    %159 = vmatpush1.msra.mxu0 0.0
    %160 = vmatprep.subr.mxu0 0.0
    %161 = vmatpush1.msra.mxu0 0.0
    %162 = vmatprep.subr.mxu0 0.0
    %163 = vmatpush1.msra.mxu0 0.0
    %164 = vmatprep.subr.mxu0 0.0
    %165 = vmatpush1.msra.mxu0 0.0
    %166 = vmatprep.subr.mxu0 0.0
    %167 = vmatpush1.msra.mxu0 0.0
    %168 = vmatprep.mubr.f32.mxu0 0.0
    %169 = vmatmul.mubr.f32.gmra.mrb[0].mxu0 %v95
    %v170 = vpop.f32.mrb[0].mxu0
    %v171 = vadd.f32 %v86, %v170
    %v172 = vpop.f32.mrb[0].mxu0
    %v173 = vadd.f32 %v90, %v172
    %174 = vdwg.mxu0
    %v175 = vmul.f32 %v171, 0.5
    %v176 = vmul.f32 %v173, 0.5
    %v177 = vmul.f32 %v171, 0.70710677
    %v178 = vmul.f32 %v173, 0.70710677
    %v179 = verf.f32.pop %v177
    %v180 = verf.f32.pop %v178
    %v181 = vadd.f32 %v179, 1.0
    %v182 = vadd.f32 %v180, 1.0
    %v183 = vmul.f32 %v175, %v181
    %v184 = vmul.f32 %v176, %v182
    %v185 = vld [vmem:[#allocation7] sm:$0xff]
    %v186 = vld [vmem:[#allocation7 + $0x8] sm:$0xff]
    %v187 = vld [vmem:[#allocation7 + $0x20] sm:$0xff]
    %v188 = vld [vmem:[#allocation7 + $0x28] sm:$0xff]
    %v189 = vld [vmem:[#allocation7 + $0x40] sm:$0xff]
    %v190 = vld [vmem:[#allocation7 + $0x48] sm:$0xff]
    %v191 = vld [vmem:[#allocation7 + $0x60] sm:$0xff]
    %v192 = vld [vmem:[#allocation7 + $0x68] sm:$0xff]
    %v193 = vld [vmem:[#allocation7 + $0x80] sm:$0xff]
    %v194 = vld [vmem:[#allocation7 + $0x88] sm:$0xff]
    %v195 = vld [vmem:[#allocation7 + $0xa0] sm:$0xff]
    %v196 = vld [vmem:[#allocation7 + $0xa8] sm:$0xff]
    %v197 = vld [vmem:[#allocation7 + $0xc0] sm:$0xff]
    %v198 = vld [vmem:[#allocation7 + $0xc8] sm:$0xff]
    %v199 = vld [vmem:[#allocation7 + $0xe0] sm:$0xff]
    %v200 = vld [vmem:[#allocation7 + $0xe8] sm:$0xff]
    %v201 = vld [vmem:[#allocation7 + $0x100] sm:$0xff]
    %v202 = vld [vmem:[#allocation7 + $0x108] sm:$0xff]
    %v203 = vld [vmem:[#allocation7 + $0x120] sm:$0xff]
    %v204 = vld [vmem:[#allocation7 + $0x128] sm:$0xff]
    %v205 = vld [vmem:[#allocation7 + $0x140] sm:$0xff]
    %v206 = vld [vmem:[#allocation7 + $0x148] sm:$0xff]
    %v207 = vld [vmem:[#allocation7 + $0x160] sm:$0xff]
    %v208 = vld [vmem:[#allocation7 + $0x168] sm:$0xff]
    %v209 = vld [vmem:[#allocation7 + $0x180] sm:$0xff]
    %v210 = vld [vmem:[#allocation7 + $0x188] sm:$0xff]
    %v211 = vld [vmem:[#allocation7 + $0x1a0] sm:$0xff]
    %v212 = vld [vmem:[#allocation7 + $0x1a8] sm:$0xff]
    %v213 = vld [vmem:[#allocation7 + $0x1c0] sm:$0xff]
    %v214 = vld [vmem:[#allocation7 + $0x1c8] sm:$0xff]
    %v215 = vld [vmem:[#allocation7 + $0x1e0] sm:$0xff]
    %v216 = vld [vmem:[#allocation7 + $0x1e8] sm:$0xff]
    %v217 = vld [vmem:[#allocation7 + $0x200] sm:$0xff]
    %v218 = vld [vmem:[#allocation7 + $0x208] sm:$0xff]
    %v219 = vld [vmem:[#allocation7 + $0x220] sm:$0xff]
    %v220 = vld [vmem:[#allocation7 + $0x228] sm:$0xff]
    %v221 = vld [vmem:[#allocation7 + $0x240] sm:$0xff]
    %v222 = vld [vmem:[#allocation7 + $0x248] sm:$0xff]
    %v223 = vld [vmem:[#allocation7 + $0x260] sm:$0xff]
    %v224 = vld [vmem:[#allocation7 + $0x268] sm:$0xff]
    %v225 = vld [vmem:[#allocation7 + $0x280] sm:$0xff]
    %v226 = vld [vmem:[#allocation7 + $0x288] sm:$0xff]
    %v227 = vld [vmem:[#allocation7 + $0x2a0] sm:$0xff]
    %v228 = vld [vmem:[#allocation7 + $0x2a8] sm:$0xff]
    %v229 = vld [vmem:[#allocation7 + $0x2c0] sm:$0xff]
    %v230 = vld [vmem:[#allocation7 + $0x2c8] sm:$0xff]
    %v231 = vld [vmem:[#allocation7 + $0x2e0] sm:$0xff]
    %v232 = vld [vmem:[#allocation7 + $0x2e8] sm:$0xff]
    %v233 = vld [vmem:[#allocation7 + $0x300] sm:$0xff]
    %v234 = vld [vmem:[#allocation7 + $0x308] sm:$0xff]
    %v235 = vld [vmem:[#allocation7 + $0x320] sm:$0xff]
    %v236 = vld [vmem:[#allocation7 + $0x328] sm:$0xff]
    %v237 = vld [vmem:[#allocation7 + $0x340] sm:$0xff]
    %v238 = vld [vmem:[#allocation7 + $0x348] sm:$0xff]
    %v239 = vld [vmem:[#allocation7 + $0x360] sm:$0xff]
    %v240 = vld [vmem:[#allocation7 + $0x368] sm:$0xff]
    %v241 = vld [vmem:[#allocation7 + $0x380] sm:$0xff]
    %v242 = vld [vmem:[#allocation7 + $0x388] sm:$0xff]
    %v243 = vld [vmem:[#allocation7 + $0x3a0] sm:$0xff]
    %v244 = vld [vmem:[#allocation7 + $0x3a8] sm:$0xff]
    %v245 = vld [vmem:[#allocation7 + $0x3c0] sm:$0xff]
    %v246 = vld [vmem:[#allocation7 + $0x3c8] sm:$0xff]
    %v247 = vld [vmem:[#allocation7 + $0x3e0] sm:$0xff]
    %v248 = vld [vmem:[#allocation7 + $0x3e8] sm:$0xff]
    %v249 = vld [vmem:[%s4] sm:$0x3]
    %v251 = vlaneseq
    %v252 = vshrl.u32 %v251, 7
    %v253 = vsub.s32 0, %v252
    %v254 = vrot.slane %v249, %v253
    %v255 = vlaneseq
    %v256 = vshrl.u32 %v255, 7
    %v257 = vsub.s32 1, %v256
    %v258 = vrot.slane %v249, %v257
    %261 = vmatprep.subr.mxu0 %v186
    %262 = vmatpush1.msra.mxu0 %v185
    %263 = vmatprep.subr.mxu0 %v188
    %264 = vmatpush1.msra.mxu0 %v187
    %265 = vmatprep.subr.mxu0 %v190
    %266 = vmatpush1.msra.mxu0 %v189
    %267 = vmatprep.subr.mxu0 %v192
    %268 = vmatpush1.msra.mxu0 %v191
    %269 = vmatprep.subr.mxu0 %v194
    %270 = vmatpush1.msra.mxu0 %v193
    %271 = vmatprep.subr.mxu0 %v196
    %272 = vmatpush1.msra.mxu0 %v195
    %273 = vmatprep.subr.mxu0 %v198
    %274 = vmatpush1.msra.mxu0 %v197
    %275 = vmatprep.subr.mxu0 %v200
    %276 = vmatpush1.msra.mxu0 %v199
    %277 = vmatprep.subr.mxu0 %v202
    %278 = vmatpush1.msra.mxu0 %v201
    %279 = vmatprep.subr.mxu0 %v204
    %280 = vmatpush1.msra.mxu0 %v203
    %281 = vmatprep.subr.mxu0 %v206
    %282 = vmatpush1.msra.mxu0 %v205
    %283 = vmatprep.subr.mxu0 %v208
    %284 = vmatpush1.msra.mxu0 %v207
    %285 = vmatprep.subr.mxu0 %v210
    %286 = vmatpush1.msra.mxu0 %v209
    %287 = vmatprep.subr.mxu0 %v212
    %288 = vmatpush1.msra.mxu0 %v211
    %289 = vmatprep.subr.mxu0 %v214
    %290 = vmatpush1.msra.mxu0 %v213
    %291 = vmatprep.subr.mxu0 %v216
    %292 = vmatpush1.msra.mxu0 %v215
    %293 = vmatprep.subr.mxu0 %v218
    %294 = vmatpush1.msra.mxu0 %v217
    %295 = vmatprep.subr.mxu0 %v220
    %296 = vmatpush1.msra.mxu0 %v219
    %297 = vmatprep.subr.mxu0 %v222
    %298 = vmatpush1.msra.mxu0 %v221
    %299 = vmatprep.subr.mxu0 %v224
    %300 = vmatpush1.msra.mxu0 %v223
    %301 = vmatprep.subr.mxu0 %v226
    %302 = vmatpush1.msra.mxu0 %v225
    %303 = vmatprep.subr.mxu0 %v228
    %304 = vmatpush1.msra.mxu0 %v227
    %305 = vmatprep.subr.mxu0 %v230
    %306 = vmatpush1.msra.mxu0 %v229
    %307 = vmatprep.subr.mxu0 %v232
    %308 = vmatpush1.msra.mxu0 %v231
    %309 = vmatprep.subr.mxu0 %v234
    %310 = vmatpush1.msra.mxu0 %v233
    %311 = vmatprep.subr.mxu0 %v236
    %312 = vmatpush1.msra.mxu0 %v235
    %313 = vmatprep.subr.mxu0 %v238
    %314 = vmatpush1.msra.mxu0 %v237
    %315 = vmatprep.subr.mxu0 %v240
    %316 = vmatpush1.msra.mxu0 %v239
    %317 = vmatprep.subr.mxu0 %v242
    %318 = vmatpush1.msra.mxu0 %v241
    %319 = vmatprep.subr.mxu0 %v244
    %320 = vmatpush1.msra.mxu0 %v243
    %321 = vmatprep.subr.mxu0 %v246
    %322 = vmatpush1.msra.mxu0 %v245
    %323 = vmatprep.subr.mxu0 %v248
    %324 = vmatpush1.msra.mxu0 %v247
    %325 = vmatprep.mubr.f32.mxu0 %v184
    %326 = vmatmul.mubr.f32.gmra.mrb[0].mxu0 %v183
    %v327 = vpop.f32.mrb[0].mxu0
    %v328 = vadd.f32 %v254, %v327
    %v329 = vpop.f32.mrb[0].mxu0
    %v330 = vadd.f32 %v258, %v329
    %331 = vdwg.mxu0
    %v332 = vmul.f32 %v328, 0.5
    %v333 = vmul.f32 %v330, 0.5
    %v334 = vmul.f32 %v328, 0.70710677
    %v335 = vmul.f32 %v330, 0.70710677
    %v336 = verf.f32.pop %v334
    %v337 = verf.f32.pop %v335
    %v338 = vadd.f32 %v336, 1.0
    %v339 = vadd.f32 %v337, 1.0
    %v340 = vmul.f32 %v332, %v338
    %v341 = vmul.f32 %v333, %v339
    %v342 = vld [vmem:[#allocation8] sm:$0xff]
    %v343 = vld [vmem:[#allocation8 + $0x8] sm:$0xff]
    %v344 = vld [vmem:[#allocation8 + $0x10] sm:$0xff]
    %v345 = vld [vmem:[#allocation8 + $0x18] sm:$0xff]
    %v346 = vld [vmem:[#allocation8 + $0x20] sm:$0xff]
    %v347 = vld [vmem:[#allocation8 + $0x28] sm:$0xff]
    %v348 = vld [vmem:[#allocation8 + $0x30] sm:$0xff]
    %v349 = vld [vmem:[#allocation8 + $0x38] sm:$0xff]
    %v350 = vld [vmem:[#allocation8 + $0x40] sm:$0xff]
    %v351 = vld [vmem:[#allocation8 + $0x48] sm:$0xff]
    %v352 = vld [vmem:[#allocation8 + $0x50] sm:$0xff]
    %v353 = vld [vmem:[#allocation8 + $0x58] sm:$0xff]
    %v354 = vld [vmem:[#allocation8 + $0x60] sm:$0xff]
    %v355 = vld [vmem:[#allocation8 + $0x68] sm:$0xff]
    %v356 = vld [vmem:[#allocation8 + $0x70] sm:$0xff]
    %v357 = vld [vmem:[#allocation8 + $0x78] sm:$0xff]
    %v358 = vld [vmem:[#allocation8 + $0x80] sm:$0xff]
    %v359 = vld [vmem:[#allocation8 + $0x88] sm:$0xff]
    %v360 = vld [vmem:[#allocation8 + $0x90] sm:$0xff]
    %v361 = vld [vmem:[#allocation8 + $0x98] sm:$0xff]
    %v362 = vld [vmem:[#allocation8 + $0xa0] sm:$0xff]
    %v363 = vld [vmem:[#allocation8 + $0xa8] sm:$0xff]
    %v364 = vld [vmem:[#allocation8 + $0xb0] sm:$0xff]
    %v365 = vld [vmem:[#allocation8 + $0xb8] sm:$0xff]
    %v366 = vld [vmem:[#allocation8 + $0xc0] sm:$0xff]
    %v367 = vld [vmem:[#allocation8 + $0xc8] sm:$0xff]
    %v368 = vld [vmem:[#allocation8 + $0xd0] sm:$0xff]
    %v369 = vld [vmem:[#allocation8 + $0xd8] sm:$0xff]
    %v370 = vld [vmem:[#allocation8 + $0xe0] sm:$0xff]
    %v371 = vld [vmem:[#allocation8 + $0xe8] sm:$0xff]
    %v372 = vld [vmem:[#allocation8 + $0xf0] sm:$0xff]
    %v373 = vld [vmem:[#allocation8 + $0xf8] sm:$0xff]
    %v374 = vld [vmem:[#allocation8 + $0x100] sm:$0xff]
    %v375 = vld [vmem:[#allocation8 + $0x108] sm:$0xff]
    %v376 = vld [vmem:[#allocation8 + $0x110] sm:$0xff]
    %v377 = vld [vmem:[#allocation8 + $0x118] sm:$0xff]
    %v378 = vld [vmem:[#allocation8 + $0x120] sm:$0xff]
    %v379 = vld [vmem:[#allocation8 + $0x128] sm:$0xff]
    %v380 = vld [vmem:[#allocation8 + $0x130] sm:$0xff]
    %v381 = vld [vmem:[#allocation8 + $0x138] sm:$0xff]
    %v382 = vld [vmem:[#allocation8 + $0x140] sm:$0xff]
    %v383 = vld [vmem:[#allocation8 + $0x148] sm:$0xff]
    %v384 = vld [vmem:[#allocation8 + $0x150] sm:$0xff]
    %v385 = vld [vmem:[#allocation8 + $0x158] sm:$0xff]
    %v386 = vld [vmem:[#allocation8 + $0x160] sm:$0xff]
    %v387 = vld [vmem:[#allocation8 + $0x168] sm:$0xff]
    %v388 = vld [vmem:[#allocation8 + $0x170] sm:$0xff]
    %v389 = vld [vmem:[#allocation8 + $0x178] sm:$0xff]
    %v390 = vld [vmem:[#allocation8 + $0x180] sm:$0xff]
    %v391 = vld [vmem:[#allocation8 + $0x188] sm:$0xff]
    %v392 = vld [vmem:[#allocation8 + $0x190] sm:$0xff]
    %v393 = vld [vmem:[#allocation8 + $0x198] sm:$0xff]
    %v394 = vld [vmem:[#allocation8 + $0x1a0] sm:$0xff]
    %v395 = vld [vmem:[#allocation8 + $0x1a8] sm:$0xff]
    %v396 = vld [vmem:[#allocation8 + $0x1b0] sm:$0xff]
    %v397 = vld [vmem:[#allocation8 + $0x1b8] sm:$0xff]
    %v398 = vld [vmem:[#allocation8 + $0x1c0] sm:$0xff]
    %v399 = vld [vmem:[#allocation8 + $0x1c8] sm:$0xff]
    %v400 = vld [vmem:[#allocation8 + $0x1d0] sm:$0xff]
    %v401 = vld [vmem:[#allocation8 + $0x1d8] sm:$0xff]
    %v402 = vld [vmem:[#allocation8 + $0x1e0] sm:$0xff]
    %v403 = vld [vmem:[#allocation8 + $0x1e8] sm:$0xff]
    %v404 = vld [vmem:[#allocation8 + $0x1f0] sm:$0xff]
    %v405 = vld [vmem:[#allocation8 + $0x1f8] sm:$0xff]
    %v406 = vld [vmem:[#allocation7 + $0x10] sm:$0xff]
    %v407 = vld [vmem:[#allocation7 + $0x18] sm:$0xff]
    %v408 = vld [vmem:[#allocation7 + $0x30] sm:$0xff]
    %v409 = vld [vmem:[#allocation7 + $0x38] sm:$0xff]
    %v410 = vld [vmem:[#allocation7 + $0x50] sm:$0xff]
    %v411 = vld [vmem:[#allocation7 + $0x58] sm:$0xff]
    %v412 = vld [vmem:[#allocation7 + $0x70] sm:$0xff]
    %v413 = vld [vmem:[#allocation7 + $0x78] sm:$0xff]
    %v414 = vld [vmem:[#allocation7 + $0x90] sm:$0xff]
    %v415 = vld [vmem:[#allocation7 + $0x98] sm:$0xff]
    %v416 = vld [vmem:[#allocation7 + $0xb0] sm:$0xff]
    %v417 = vld [vmem:[#allocation7 + $0xb8] sm:$0xff]
    %v418 = vld [vmem:[#allocation7 + $0xd0] sm:$0xff]
    %v419 = vld [vmem:[#allocation7 + $0xd8] sm:$0xff]
    %v420 = vld [vmem:[#allocation7 + $0xf0] sm:$0xff]
    %v421 = vld [vmem:[#allocation7 + $0xf8] sm:$0xff]
    %v422 = vld [vmem:[#allocation7 + $0x110] sm:$0xff]
    %v423 = vld [vmem:[#allocation7 + $0x118] sm:$0xff]
    %v424 = vld [vmem:[#allocation7 + $0x130] sm:$0xff]
    %v425 = vld [vmem:[#allocation7 + $0x138] sm:$0xff]
    %v426 = vld [vmem:[#allocation7 + $0x150] sm:$0xff]
    %v427 = vld [vmem:[#allocation7 + $0x158] sm:$0xff]
    %v428 = vld [vmem:[#allocation7 + $0x170] sm:$0xff]
    %v429 = vld [vmem:[#allocation7 + $0x178] sm:$0xff]
    %v430 = vld [vmem:[#allocation7 + $0x190] sm:$0xff]
    %v431 = vld [vmem:[#allocation7 + $0x198] sm:$0xff]
    %v432 = vld [vmem:[#allocation7 + $0x1b0] sm:$0xff]
    %v433 = vld [vmem:[#allocation7 + $0x1b8] sm:$0xff]
    %v434 = vld [vmem:[#allocation7 + $0x1d0] sm:$0xff]
    %v435 = vld [vmem:[#allocation7 + $0x1d8] sm:$0xff]
    %v436 = vld [vmem:[#allocation7 + $0x1f0] sm:$0xff]
    %v437 = vld [vmem:[#allocation7 + $0x1f8] sm:$0xff]
    %v438 = vld [vmem:[#allocation7 + $0x210] sm:$0xff]
    %v439 = vld [vmem:[#allocation7 + $0x218] sm:$0xff]
    %v440 = vld [vmem:[#allocation7 + $0x230] sm:$0xff]
    %v441 = vld [vmem:[#allocation7 + $0x238] sm:$0xff]
    %v442 = vld [vmem:[#allocation7 + $0x250] sm:$0xff]
    %v443 = vld [vmem:[#allocation7 + $0x258] sm:$0xff]
    %v444 = vld [vmem:[#allocation7 + $0x270] sm:$0xff]
    %v445 = vld [vmem:[#allocation7 + $0x278] sm:$0xff]
    %v446 = vld [vmem:[#allocation7 + $0x290] sm:$0xff]
    %v447 = vld [vmem:[#allocation7 + $0x298] sm:$0xff]
    %v448 = vld [vmem:[#allocation7 + $0x2b0] sm:$0xff]
    %v449 = vld [vmem:[#allocation7 + $0x2b8] sm:$0xff]
    %v450 = vld [vmem:[#allocation7 + $0x2d0] sm:$0xff]
    %v451 = vld [vmem:[#allocation7 + $0x2d8] sm:$0xff]
    %v452 = vld [vmem:[#allocation7 + $0x2f0] sm:$0xff]
    %v453 = vld [vmem:[#allocation7 + $0x2f8] sm:$0xff]
    %v454 = vld [vmem:[#allocation7 + $0x310] sm:$0xff]
    %v455 = vld [vmem:[#allocation7 + $0x318] sm:$0xff]
    %v456 = vld [vmem:[#allocation7 + $0x330] sm:$0xff]
    %v457 = vld [vmem:[#allocation7 + $0x338] sm:$0xff]
    %v458 = vld [vmem:[#allocation7 + $0x350] sm:$0xff]
    %v459 = vld [vmem:[#allocation7 + $0x358] sm:$0xff]
    %v460 = vld [vmem:[#allocation7 + $0x370] sm:$0xff]
    %v461 = vld [vmem:[#allocation7 + $0x378] sm:$0xff]
    %v462 = vld [vmem:[#allocation7 + $0x390] sm:$0xff]
    %v463 = vld [vmem:[#allocation7 + $0x398] sm:$0xff]
    %v464 = vld [vmem:[#allocation7 + $0x3b0] sm:$0xff]
    %v465 = vld [vmem:[#allocation7 + $0x3b8] sm:$0xff]
    %v466 = vld [vmem:[#allocation7 + $0x3d0] sm:$0xff]
    %v467 = vld [vmem:[#allocation7 + $0x3d8] sm:$0xff]
    %v468 = vld [vmem:[#allocation7 + $0x3f0] sm:$0xff]
    %v469 = vld [vmem:[#allocation7 + $0x3f8] sm:$0xff]
    %v470 = vld [vmem:[%s4 + $0x2] sm:$0x3]
    %v472 = vlaneseq
    %v473 = vshrl.u32 %v472, 7
    %v474 = vsub.s32 0, %v473
    %v475 = vrot.slane %v470, %v474
    %v476 = vlaneseq
    %v477 = vshrl.u32 %v476, 7
    %v478 = vsub.s32 1, %v477
    %v479 = vrot.slane %v470, %v478
    %482 = vmatprep.subr.mxu0 %v407
    %483 = vmatpush1.msra.mxu0 %v406
    %484 = vmatprep.subr.mxu0 %v409
    %485 = vmatpush1.msra.mxu0 %v408
    %486 = vmatprep.subr.mxu0 %v411
    %487 = vmatpush1.msra.mxu0 %v410
    %488 = vmatprep.subr.mxu0 %v413
    %489 = vmatpush1.msra.mxu0 %v412
    %490 = vmatprep.subr.mxu0 %v415
    %491 = vmatpush1.msra.mxu0 %v414
    %492 = vmatprep.subr.mxu0 %v417
    %493 = vmatpush1.msra.mxu0 %v416
    %494 = vmatprep.subr.mxu0 %v419
    %495 = vmatpush1.msra.mxu0 %v418
    %496 = vmatprep.subr.mxu0 %v421
    %497 = vmatpush1.msra.mxu0 %v420
    %498 = vmatprep.subr.mxu0 %v423
    %499 = vmatpush1.msra.mxu0 %v422
    %500 = vmatprep.subr.mxu0 %v425
    %501 = vmatpush1.msra.mxu0 %v424
    %502 = vmatprep.subr.mxu0 %v427
    %503 = vmatpush1.msra.mxu0 %v426
    %504 = vmatprep.subr.mxu0 %v429
    %505 = vmatpush1.msra.mxu0 %v428
    %506 = vmatprep.subr.mxu0 %v431
    %507 = vmatpush1.msra.mxu0 %v430
    %508 = vmatprep.subr.mxu0 %v433
    %509 = vmatpush1.msra.mxu0 %v432
    %510 = vmatprep.subr.mxu0 %v435
    %511 = vmatpush1.msra.mxu0 %v434
    %512 = vmatprep.subr.mxu0 %v437
    %513 = vmatpush1.msra.mxu0 %v436
    %514 = vmatprep.subr.mxu0 %v439
    %515 = vmatpush1.msra.mxu0 %v438
    %516 = vmatprep.subr.mxu0 %v441
    %517 = vmatpush1.msra.mxu0 %v440
    %518 = vmatprep.subr.mxu0 %v443
    %519 = vmatpush1.msra.mxu0 %v442
    %520 = vmatprep.subr.mxu0 %v445
    %521 = vmatpush1.msra.mxu0 %v444
    %522 = vmatprep.subr.mxu0 %v447
    %523 = vmatpush1.msra.mxu0 %v446
    %524 = vmatprep.subr.mxu0 %v449
    %525 = vmatpush1.msra.mxu0 %v448
    %526 = vmatprep.subr.mxu0 %v451
    %527 = vmatpush1.msra.mxu0 %v450
    %528 = vmatprep.subr.mxu0 %v453
    %529 = vmatpush1.msra.mxu0 %v452
    %530 = vmatprep.subr.mxu0 %v455
    %531 = vmatpush1.msra.mxu0 %v454
    %532 = vmatprep.subr.mxu0 %v457
    %533 = vmatpush1.msra.mxu0 %v456
    %534 = vmatprep.subr.mxu0 %v459
    %535 = vmatpush1.msra.mxu0 %v458
    %536 = vmatprep.subr.mxu0 %v461
    %537 = vmatpush1.msra.mxu0 %v460
    %538 = vmatprep.subr.mxu0 %v463
    %539 = vmatpush1.msra.mxu0 %v462
    %540 = vmatprep.subr.mxu0 %v465
    %541 = vmatpush1.msra.mxu0 %v464
    %542 = vmatprep.subr.mxu0 %v467
    %543 = vmatpush1.msra.mxu0 %v466
    %544 = vmatprep.subr.mxu0 %v469
    %545 = vmatpush1.msra.mxu0 %v468
    %546 = vmatprep.mubr.f32.mxu0 %v184
    %547 = vmatmul.mubr.f32.gmra.mrb[0].mxu0 %v183
    %v548 = vpop.f32.mrb[0].mxu0
    %v549 = vadd.f32 %v475, %v548
    %v550 = vpop.f32.mrb[0].mxu0
    %v551 = vadd.f32 %v479, %v550
    %552 = vdwg.mxu0
    %v553 = vmul.f32 %v549, 0.5
    %v554 = vmul.f32 %v551, 0.5
    %v555 = vmul.f32 %v549, 0.70710677
    %v556 = vmul.f32 %v551, 0.70710677
    %v557 = verf.f32.pop %v555
    %v558 = verf.f32.pop %v556
    %v559 = vadd.f32 %v557, 1.0
    %v560 = vadd.f32 %v558, 1.0
    %v561 = vmul.f32 %v553, %v559
    %v562 = vmul.f32 %v554, %v560
    %v563 = vld [vmem:[#allocation8 + $0x200] sm:$0xff]
    %v564 = vld [vmem:[#allocation8 + $0x208] sm:$0xff]
    %v565 = vld [vmem:[#allocation8 + $0x210] sm:$0xff]
    %v566 = vld [vmem:[#allocation8 + $0x218] sm:$0xff]
    %v567 = vld [vmem:[#allocation8 + $0x220] sm:$0xff]
    %v568 = vld [vmem:[#allocation8 + $0x228] sm:$0xff]
    %v569 = vld [vmem:[#allocation8 + $0x230] sm:$0xff]
    %v570 = vld [vmem:[#allocation8 + $0x238] sm:$0xff]
    %v571 = vld [vmem:[#allocation8 + $0x240] sm:$0xff]
    %v572 = vld [vmem:[#allocation8 + $0x248] sm:$0xff]
    %v573 = vld [vmem:[#allocation8 + $0x250] sm:$0xff]
    %v574 = vld [vmem:[#allocation8 + $0x258] sm:$0xff]
    %v575 = vld [vmem:[#allocation8 + $0x260] sm:$0xff]
    %v576 = vld [vmem:[#allocation8 + $0x268] sm:$0xff]
    %v577 = vld [vmem:[#allocation8 + $0x270] sm:$0xff]
    %v578 = vld [vmem:[#allocation8 + $0x278] sm:$0xff]
    %v579 = vld [vmem:[#allocation8 + $0x280] sm:$0xff]
    %v580 = vld [vmem:[#allocation8 + $0x288] sm:$0xff]
    %v581 = vld [vmem:[#allocation8 + $0x290] sm:$0xff]
    %v582 = vld [vmem:[#allocation8 + $0x298] sm:$0xff]
    %v583 = vld [vmem:[#allocation8 + $0x2a0] sm:$0xff]
    %v584 = vld [vmem:[#allocation8 + $0x2a8] sm:$0xff]
    %v585 = vld [vmem:[#allocation8 + $0x2b0] sm:$0xff]
    %v586 = vld [vmem:[#allocation8 + $0x2b8] sm:$0xff]
    %v587 = vld [vmem:[#allocation8 + $0x2c0] sm:$0xff]
    %v588 = vld [vmem:[#allocation8 + $0x2c8] sm:$0xff]
    %v589 = vld [vmem:[#allocation8 + $0x2d0] sm:$0xff]
    %v590 = vld [vmem:[#allocation8 + $0x2d8] sm:$0xff]
    %v591 = vld [vmem:[#allocation8 + $0x2e0] sm:$0xff]
    %v592 = vld [vmem:[#allocation8 + $0x2e8] sm:$0xff]
    %v593 = vld [vmem:[#allocation8 + $0x2f0] sm:$0xff]
    %v594 = vld [vmem:[#allocation8 + $0x2f8] sm:$0xff]
    %v595 = vld [vmem:[#allocation8 + $0x300] sm:$0xff]
    %v596 = vld [vmem:[#allocation8 + $0x308] sm:$0xff]
    %v597 = vld [vmem:[#allocation8 + $0x310] sm:$0xff]
    %v598 = vld [vmem:[#allocation8 + $0x318] sm:$0xff]
    %v599 = vld [vmem:[#allocation8 + $0x320] sm:$0xff]
    %v600 = vld [vmem:[#allocation8 + $0x328] sm:$0xff]
    %v601 = vld [vmem:[#allocation8 + $0x330] sm:$0xff]
    %v602 = vld [vmem:[#allocation8 + $0x338] sm:$0xff]
    %v603 = vld [vmem:[#allocation8 + $0x340] sm:$0xff]
    %v604 = vld [vmem:[#allocation8 + $0x348] sm:$0xff]
    %v605 = vld [vmem:[#allocation8 + $0x350] sm:$0xff]
    %v606 = vld [vmem:[#allocation8 + $0x358] sm:$0xff]
    %v607 = vld [vmem:[#allocation8 + $0x360] sm:$0xff]
    %v608 = vld [vmem:[#allocation8 + $0x368] sm:$0xff]
    %v609 = vld [vmem:[#allocation8 + $0x370] sm:$0xff]
    %v610 = vld [vmem:[#allocation8 + $0x378] sm:$0xff]
    %v611 = vld [vmem:[#allocation8 + $0x380] sm:$0xff]
    %v612 = vld [vmem:[#allocation8 + $0x388] sm:$0xff]
    %v613 = vld [vmem:[#allocation8 + $0x390] sm:$0xff]
    %v614 = vld [vmem:[#allocation8 + $0x398] sm:$0xff]
    %v615 = vld [vmem:[#allocation8 + $0x3a0] sm:$0xff]
    %v616 = vld [vmem:[#allocation8 + $0x3a8] sm:$0xff]
    %v617 = vld [vmem:[#allocation8 + $0x3b0] sm:$0xff]
    %v618 = vld [vmem:[#allocation8 + $0x3b8] sm:$0xff]
    %v619 = vld [vmem:[#allocation8 + $0x3c0] sm:$0xff]
    %v620 = vld [vmem:[#allocation8 + $0x3c8] sm:$0xff]
    %v621 = vld [vmem:[#allocation8 + $0x3d0] sm:$0xff]
    %v622 = vld [vmem:[#allocation8 + $0x3d8] sm:$0xff]
    %v623 = vld [vmem:[#allocation8 + $0x3e0] sm:$0xff]
    %v624 = vld [vmem:[#allocation8 + $0x3e8] sm:$0xff]
    %v625 = vld [vmem:[#allocation8 + $0x3f0] sm:$0xff]
    %v626 = vld [vmem:[#allocation8 + $0x3f8] sm:$0xff]
    %627 = vmatprep.subr.mxu0 %v564
    %628 = vmatpush1.msra.mxu0 %v563
    %629 = vmatprep.subr.mxu0 %v566
    %630 = vmatpush1.msra.mxu0 %v565
    %631 = vmatprep.subr.mxu0 %v568
    %632 = vmatpush1.msra.mxu0 %v567
    %633 = vmatprep.subr.mxu0 %v570
    %634 = vmatpush1.msra.mxu0 %v569
    %635 = vmatprep.subr.mxu0 %v572
    %636 = vmatpush1.msra.mxu0 %v571
    %637 = vmatprep.subr.mxu0 %v574
    %638 = vmatpush1.msra.mxu0 %v573
    %639 = vmatprep.subr.mxu0 %v576
    %640 = vmatpush1.msra.mxu0 %v575
    %641 = vmatprep.subr.mxu0 %v578
    %642 = vmatpush1.msra.mxu0 %v577
    %643 = vmatprep.subr.mxu0 %v580
    %644 = vmatpush1.msra.mxu0 %v579
    %645 = vmatprep.subr.mxu0 %v582
    %646 = vmatpush1.msra.mxu0 %v581
    %647 = vmatprep.subr.mxu0 %v584
    %648 = vmatpush1.msra.mxu0 %v583
    %649 = vmatprep.subr.mxu0 %v586
    %650 = vmatpush1.msra.mxu0 %v585
    %651 = vmatprep.subr.mxu0 %v588
    %652 = vmatpush1.msra.mxu0 %v587
    %653 = vmatprep.subr.mxu0 %v590
    %654 = vmatpush1.msra.mxu0 %v589
    %655 = vmatprep.subr.mxu0 %v592
    %656 = vmatpush1.msra.mxu0 %v591
    %657 = vmatprep.subr.mxu0 %v594
    %658 = vmatpush1.msra.mxu0 %v593
    %659 = vmatprep.subr.mxu0 %v596
    %660 = vmatpush1.msra.mxu0 %v595
    %661 = vmatprep.subr.mxu0 %v598
    %662 = vmatpush1.msra.mxu0 %v597
    %663 = vmatprep.subr.mxu0 %v600
    %664 = vmatpush1.msra.mxu0 %v599
    %665 = vmatprep.subr.mxu0 %v602
    %666 = vmatpush1.msra.mxu0 %v601
    %667 = vmatprep.subr.mxu0 %v604
    %668 = vmatpush1.msra.mxu0 %v603
    %669 = vmatprep.subr.mxu0 %v606
    %670 = vmatpush1.msra.mxu0 %v605
    %671 = vmatprep.subr.mxu0 %v608
    %672 = vmatpush1.msra.mxu0 %v607
    %673 = vmatprep.subr.mxu0 %v610
    %674 = vmatpush1.msra.mxu0 %v609
    %675 = vmatprep.subr.mxu0 %v612
    %676 = vmatpush1.msra.mxu0 %v611
    %677 = vmatprep.subr.mxu0 %v614
    %678 = vmatpush1.msra.mxu0 %v613
    %679 = vmatprep.subr.mxu0 %v616
    %680 = vmatpush1.msra.mxu0 %v615
    %681 = vmatprep.subr.mxu0 %v618
    %682 = vmatpush1.msra.mxu0 %v617
    %683 = vmatprep.subr.mxu0 %v620
    %684 = vmatpush1.msra.mxu0 %v619
    %685 = vmatprep.subr.mxu0 %v622
    %686 = vmatpush1.msra.mxu0 %v621
    %687 = vmatprep.subr.mxu0 %v624
    %688 = vmatpush1.msra.mxu0 %v623
    %689 = vmatprep.subr.mxu0 %v626
    %690 = vmatpush1.msra.mxu0 %v625
    %691 = vmatprep.mubr.f32.mxu0 %v562
    %692 = vmatmul.mubr.f32.gmra.mrb[0].mxu0 %v561
    %v693 = vpop.f32.mrb[0].mxu0
    %v694 = vadd.f32 0.0, %v693
    %v695 = vpop.f32.mrb[0].mxu0
    %v696 = vadd.f32 0.0, %v695
    %697 = vdwg.mxu0
    %698 = vmatprep.subr.mxu0 %v343
    %699 = vmatpush1.msra.mxu0 %v342
    %700 = vmatprep.subr.mxu0 %v345
    %701 = vmatpush1.msra.mxu0 %v344
    %702 = vmatprep.subr.mxu0 %v347
    %703 = vmatpush1.msra.mxu0 %v346
    %704 = vmatprep.subr.mxu0 %v349
    %705 = vmatpush1.msra.mxu0 %v348
    %706 = vmatprep.subr.mxu0 %v351
    %707 = vmatpush1.msra.mxu0 %v350
    %708 = vmatprep.subr.mxu0 %v353
    %709 = vmatpush1.msra.mxu0 %v352
    %710 = vmatprep.subr.mxu0 %v355
    %711 = vmatpush1.msra.mxu0 %v354
    %712 = vmatprep.subr.mxu0 %v357
    %713 = vmatpush1.msra.mxu0 %v356
    %714 = vmatprep.subr.mxu0 %v359
    %715 = vmatpush1.msra.mxu0 %v358
    %716 = vmatprep.subr.mxu0 %v361
    %717 = vmatpush1.msra.mxu0 %v360
    %718 = vmatprep.subr.mxu0 %v363
    %719 = vmatpush1.msra.mxu0 %v362
    %720 = vmatprep.subr.mxu0 %v365
    %721 = vmatpush1.msra.mxu0 %v364
    %722 = vmatprep.subr.mxu0 %v367
    %723 = vmatpush1.msra.mxu0 %v366
    %724 = vmatprep.subr.mxu0 %v369
    %725 = vmatpush1.msra.mxu0 %v368
    %726 = vmatprep.subr.mxu0 %v371
    %727 = vmatpush1.msra.mxu0 %v370
    %728 = vmatprep.subr.mxu0 %v373
    %729 = vmatpush1.msra.mxu0 %v372
    %730 = vmatprep.subr.mxu0 %v375
    %731 = vmatpush1.msra.mxu0 %v374
    %732 = vmatprep.subr.mxu0 %v377
    %733 = vmatpush1.msra.mxu0 %v376
    %734 = vmatprep.subr.mxu0 %v379
    %735 = vmatpush1.msra.mxu0 %v378
    %736 = vmatprep.subr.mxu0 %v381
    %737 = vmatpush1.msra.mxu0 %v380
    %738 = vmatprep.subr.mxu0 %v383
    %739 = vmatpush1.msra.mxu0 %v382
    %740 = vmatprep.subr.mxu0 %v385
    %741 = vmatpush1.msra.mxu0 %v384
    %742 = vmatprep.subr.mxu0 %v387
    %743 = vmatpush1.msra.mxu0 %v386
    %744 = vmatprep.subr.mxu0 %v389
    %745 = vmatpush1.msra.mxu0 %v388
    %746 = vmatprep.subr.mxu0 %v391
    %747 = vmatpush1.msra.mxu0 %v390
    %748 = vmatprep.subr.mxu0 %v393
    %749 = vmatpush1.msra.mxu0 %v392
    %750 = vmatprep.subr.mxu0 %v395
    %751 = vmatpush1.msra.mxu0 %v394
    %752 = vmatprep.subr.mxu0 %v397
    %753 = vmatpush1.msra.mxu0 %v396
    %754 = vmatprep.subr.mxu0 %v399
    %755 = vmatpush1.msra.mxu0 %v398
    %756 = vmatprep.subr.mxu0 %v401
    %757 = vmatpush1.msra.mxu0 %v400
    %758 = vmatprep.subr.mxu0 %v403
    %759 = vmatpush1.msra.mxu0 %v402
    %760 = vmatprep.subr.mxu0 %v405
    %761 = vmatpush1.msra.mxu0 %v404
    %762 = vmatprep.mubr.f32.mxu0 %v341
    %763 = vmatmul.mubr.f32.gmra.mrb[0].mxu0 %v340
    %v764 = vpop.f32.mrb[0].mxu0
    %v765 = vadd.f32 %v694, %v764
    %v766 = vpop.f32.mrb[0].mxu0
    %v767 = vadd.f32 %v696, %v766
    %768 = vdwg.mxu0
    %v769 = vld [vmem:[%s6] sm:$0x3]
    %v771 = vlaneseq
    %v772 = vshrl.u32 %v771, 7
    %v773 = vsub.s32 0, %v772
    %v774 = vrot.slane %v769, %v773
    %v775 = vlaneseq
    %v776 = vshrl.u32 %v775, 7
    %v777 = vsub.s32 1, %v776
    %v778 = vrot.slane %v769, %v777
    %v781 = vadd.f32 %v765, %v774
    %v782 = vadd.f32 %v767, %v778
    %783 = vst [vmem:[#allocation10] sm:$0xff] %v781
    %784 = vst [vmem:[#allocation10 + $0x8] sm:$0xff] %v782
    // Predicated region
    $region46: #{tpu_custom_call.1} parent=1 // pred_check
      _
    $region47: #{tpu_custom_call.1} parent=1 // pred_check_branch
      %786 = sbr.rel (0) target = $region49
    $region48: #{tpu_custom_call.1} parent=1 // pred_region
      %s788 = ssub.s32 256, 256
      %789 = vsyncadd [#allocation4], %s788
      %s791 = sshll.u32 [#allocation10], 4
      %s792 = int_to_ptr.vmem [resolvable:$true] %s791
      %794 = dma.vmem_to_hbm [thread:$0]  %s792, 256, %s7, [#allocation4]
    $region49: #{tpu_custom_call.1} parent=1 // pred_fallthru
      _
    // Predicated region
    $region50: #{tpu_custom_call.1} parent=1 // pred_check
      _
    $region51: #{tpu_custom_call.1} parent=1 // pred_check_branch
      %796 = sbr.rel (0) target = $region53
    $region52: #{tpu_custom_call.1} parent=1 // pred_region
      %797 = dma.done [#allocation4], 256
    $region53: #{tpu_custom_call.1} parent=1 // pred_fallthru
      _
    %798 = vsyncpa [#allocation3], 1
    %799 = vsyncpa [#allocation6], 1
    %800 = vsyncpa [#allocation9], 1
    %801 = vsyncpa [#allocation4], 1

</llo_original>
